<compile_context>
chip_gen: v6e
topology: v6e:2x2x1
jax: 0.10.0
libtpu: 0.0.40
codegen_flags: <defaults>
</compile_context>

<pallas_src>
import jax
import jax.numpy as jnp
import numpy as np
from jax.experimental import pallas as pl
from jax.experimental.pallas import tpu as pltpu

_LANE = 128


def _cancelout_kernel(x_ref, w_ref, o_ref):
    # Gate: tiny (1, bc) row. sigmoid runs in f32 on the EUP (idle slot in this
    # mem-bound kernel, effectively free); multiply in f32, cast on store.
    gate = jax.nn.sigmoid(w_ref[...].astype(jnp.float32))
    o_ref[...] = (x_ref[...].astype(jnp.float32) * gate).astype(o_ref.dtype)


def _row_quantum(*dtypes):
    """Native sublane packing: 8 rows for 4-byte, 16 for 2-byte, 32 for 1-byte."""
    q = 8
    for dt in dtypes:
        q = max(q, 8 * max(1, 4 // np.dtype(dt).itemsize))
    return q


def _block_dim(total, target, quantum):
    """Block size along one axis: the full extent (always legal) or a multiple
    of `quantum`; a cdiv grid handles the ragged tail block."""
    if target >= total or total <= quantum:
        return total
    return max(quantum, (target // quantum) * quantum)


def _vmem_capacity_bytes():
    """Best-effort physical VMEM query; conservative (v7x per-TC) fallback."""
    try:
        info = pltpu.get_tpu_info()
        for name in ("vmem_capacity_bytes", "vmem_size_bytes", "vmem_bytes"):
            cap = getattr(info, name, None)
            if cap:
                return int(cap)
    except Exception:
        pass
    return 64 * 1024 * 1024


def cancelout(x, weights, *, force_pallas=False, min_pallas_elements=1 << 16):
    """CancelOut forward: x * sigmoid(weights.float()), broadcast over leading dims.

    x: (..., F) array; weights: (F,) parameter (matches nn.Parameter(zeros(inp)+4)).
    """
    F = weights.shape[0]
    if x.shape[-1] != F:
        raise ValueError(f"last dim of x ({x.shape[-1]}) must equal len(weights) ({F})")
    orig_shape = x.shape
    out_dtype = jnp.result_type(x.dtype, jnp.float32)  # torch promotes vs f32 gate

    # --- Fast path: pallas_call + DMA setup overhead dwarfs the work for tiny inputs.
    if not force_pallas and x.size < min_pallas_elements:
        gate = jax.nn.sigmoid(weights.astype(jnp.float32))
        return x.astype(out_dtype) * gate.astype(out_dtype)

    x2 = x.reshape(-1, F)
    B = x2.shape[0]

    # --- Layout: make the lane (last) dim dense so stores are full-width vst.
    folded = False
    if F % _LANE == 0:
        rows, cols = B, F
        x_in, w_row = x2, weights
    elif F < _LANE and _LANE % F == 0:
        # Small feature dim (e.g. F=32): fold into 128-lane rows on the
        # flattened array; zero-pad the tail (multiplied by the gate it stays
        # zero and is sliced off below), gate row repeats 128//F times.
        folded = True
        n = B * F
        rows, cols = pl.cdiv(n, _LANE), _LANE
        pad = rows * _LANE - n
        x_flat = x2.reshape(-1)
        if pad:
            x_flat = jnp.pad(x_flat, (0, pad))
        x_in = x_flat.reshape(rows, cols)
        w_row = jnp.tile(weights, _LANE // F)
    else:
        # Odd feature dims: natural layout (lane-masked tail stores, still correct).
        rows, cols = B, F
        x_in, w_row = x2, weights

    w2d = w_row.reshape(1, cols)

    # --- Generation-aware tiling budget.
    vmem_cap = min(max(_vmem_capacity_bytes(), 32 * 1024 * 1024), 128 * 1024 * 1024)
    vmem_limit = min((vmem_cap * 3) // 4, 112 * 1024 * 1024)  # ~48 MiB v7x, ~96 MiB v5e/v6e

    in_sz = np.dtype(x_in.dtype).itemsize
    out_sz = np.dtype(out_dtype).itemsize
    row_q = _row_quantum(x_in.dtype, out_dtype)

    # Double-buffered x + out blocks should use about 2/3 of the scoped limit.
    budget_elems = max(((vmem_limit * 2) // 3) // (2 * (in_sz + out_sz)), row_q * _LANE)

    # Prefer full-width column blocks: one contiguous DMA per block and the gate
    # row is DMA'd exactly once for the whole kernel.
    col_target = max(_LANE, budget_elems // row_q)
    bc = _block_dim(cols, col_target, _LANE)
    row_target = max(row_q, budget_elems // bc)
    br = _block_dim(rows, row_target, row_q)

    # Give megacore (v7x: 2 TensorCores) at least 2 row blocks to shard.
    if pl.cdiv(rows, br) < 2 and rows >= 2 * row_q:
        half = pl.cdiv(rows, 2)
        br = ((half + row_q - 1) // row_q) * row_q

    # Column axis OUTER so the (1, bc) gate block index is constant over the
    # inner row sweep (no per-step re-DMA of the weights).
    grid = (pl.cdiv(cols, bc), pl.cdiv(rows, br))

    out2 = pl.pallas_call(
        _cancelout_kernel,
        out_shape=jax.ShapeDtypeStruct((rows, cols), out_dtype),
        grid=grid,
        in_specs=[
            pl.BlockSpec((br, bc), lambda j, i: (i, j)),
            pl.BlockSpec((1, bc), lambda j, i: (0, j)),
        ],
        out_specs=pl.BlockSpec((br, bc), lambda j, i: (i, j)),
        compiler_params=pltpu.CompilerParams(
            dimension_semantics=("parallel", "parallel"),
            vmem_limit_bytes=int(vmem_limit),
        ),
    )(x_in, w2d)

    if folded:
        out2 = out2.reshape(-1)[: B * F]
    return out2.reshape(orig_shape)


if __name__ == "__main__":
    key = jax.random.PRNGKey(0)
    inp = 32

    # Deterministic parameter init, matching torch.zeros(inp) + 4
    weights32 = jnp.zeros((inp,), dtype=jnp.float32) + 4.0
    weights256 = jnp.zeros((256,), dtype=jnp.float32) + 4.0

    def ref_fn(x, w):
        gate = jax.nn.sigmoid(w.astype(jnp.float32))
        return x.astype(jnp.float32) * gate

    k1, k2, k3, k4 = jax.random.split(key, 4)
    cases = [
        (jax.random.normal(k1, (8, inp), dtype=jnp.float32), weights32),     # lane-folded
        (jax.random.normal(k2, (7, inp), dtype=jnp.float32), weights32),     # folded + padded tail
        (jax.random.normal(k3, (2, 5, inp), dtype=jnp.float32), weights32),  # tensor input
        (jax.random.normal(k4, (48, 256), dtype=jnp.float32), weights256),   # F % 128 == 0 path
    ]

    for x, w in cases:
        out = jax.block_until_ready(cancelout(x, w, force_pallas=True))
        ref = ref_fn(x, w)
        assert out.shape == x.shape
        assert out.dtype == ref.dtype
        assert jnp.allclose(out, ref, atol=1e-5, rtol=1e-5), "mismatch vs reference"

    print("KERNEL_OK")
</pallas_src>

<mosaic_0001>
module attributes {stable_mosaic.version = 11 : i64} {
  func.func @_cancelout_kernel(%arg0: i32, %arg1: i32, %arg2: memref<2x128xf32, #tpu.memory_space<vmem>>, %arg3: memref<1x128xf32, #tpu.memory_space<vmem>>, %arg4: memref<2x128xf32, #tpu.memory_space<vmem>>) attributes {dimension_semantics = [#tpu.dimension_semantics<parallel>, #tpu.dimension_semantics<parallel>], iteration_bounds = array<i64: 1, 1>, scalar_prefetch = 0 : i64, scratch_operands = 0 : i64, tpu.core_type = #tpu.core_type<tc>, window_params = [{transform_indices = @transform_0, window_bounds = array<i64: 2, 128>}, {transform_indices = @transform_1, window_bounds = array<i64: 1, 128>}, {transform_indices = @transform_2, window_bounds = array<i64: 2, 128>}]} {
    %c0 = arith.constant 0 : index
    %c0_0 = arith.constant 0 : index
    %0 = vector.load %arg3[%c0, %c0_0] : memref<1x128xf32, #tpu.memory_space<vmem>>, vector<1x128xf32>
    %1 = arith.negf %0 : vector<1x128xf32>
    %2 = math.exp %1 : vector<1x128xf32>
    %cst = arith.constant 1.000000e+00 : f32
    %3 = vector.broadcast %cst : f32 to vector<1x128xf32>
    %4 = arith.addf %3, %2 : vector<1x128xf32>
    %5 = arith.divf %3, %4 : vector<1x128xf32>
    %c0_1 = arith.constant 0 : index
    %c0_2 = arith.constant 0 : index
    %6 = vector.load %arg2[%c0_1, %c0_2] : memref<2x128xf32, #tpu.memory_space<vmem>>, vector<2x128xf32>
    %7 = vector.broadcast %5 : vector<1x128xf32> to vector<2x128xf32>
    %8 = arith.mulf %6, %7 : vector<2x128xf32>
    %c0_3 = arith.constant 0 : index
    %c0_4 = arith.constant 0 : index
    %9 = vector.load %arg4[%c0_3, %c0_4] : memref<2x128xf32, #tpu.memory_space<vmem>>, vector<2x128xf32>
    tpu.vector_store %arg4[%c0_3, %c0_4], %8 {strides = array<i32>} : memref<2x128xf32, #tpu.memory_space<vmem>>, vector<2x128xf32>,
    return
  }
  func.func @transform_0(%arg0: i32, %arg1: i32) -> (i32, i32) {
    %c0_i32 = arith.constant 0 : i32
    return %arg1, %arg0 : i32, i32
  }
  func.func @transform_1(%arg0: i32, %arg1: i32) -> (i32, i32) {
    %c0_i32 = arith.constant 0 : i32
    %c0_i32_0 = arith.constant 0 : i32
    return %c0_i32, %arg0 : i32, i32
  }
  func.func @transform_2(%arg0: i32, %arg1: i32) -> (i32, i32) {
    %c0_i32 = arith.constant 0 : i32
    return %arg1, %arg0 : i32, i32
  }
}

</mosaic_0001>

<llo_original>
// kernel: tpu_custom_call.1
$region0: #{tpu_custom_call.1}
  #allocation0 [shape = 'u32[]', space=smem, size = 0x4, offset = 0x4, fixed_abs, tag = 'smem constant byte address 0x4 - core index']
  #allocation1 [shape = 'u32[144,128]{1,0:T(1,128)}', space=vmem, size = 0x12000, scoped, tag = 'internal scratch']
  %s0 = inlined_call_operand.hbm [shape: f32[2,128], index: 0, kind: input, shape index: {}]
  %s1 = inlined_call_operand.vmem [shape: f32[1,128], index: 1, kind: input, shape index: {}]
  %s2 = inlined_call_operand.hbm [shape: f32[2,128], index: 2, kind: output, shape index: {}]
  %s3 = sld [smem:[#allocation0]]
  $region22: #{tpu_custom_call.1} parent=0
    _
  %s5 = ssub.s32 1, %s3
  %s6 = scalar_select 0, %s5, %s3
  $region1: #{tpu_custom_call.1} parent=0
    #allocation2 [shape = 'u8[1024]{0}', space=vmem, size = 0x400, scoped, tag = 'input window, operand 0, single buffered']
    #allocation3 [shape = 's32[1]{0}', space=sflag, size = 0x4, scoped, tag = 'scoped memory for tpu_custom_call.1']
    #allocation4 [shape = 's32[1]{0}', space=sflag, size = 0x4, scoped, tag = 'scoped memory for tpu_custom_call.1']
    #allocation5 [shape = 'u8[1024]{0}', space=vmem, size = 0x400, scoped, tag = 'output window, operand 0, single buffered']
    %7 = vsyncpa [#allocation3], 0
    %8 = vsyncpa [#allocation4], 0
    // Predicated region
    $region2: #{tpu_custom_call.1} parent=1 // pred_check
      _
    $region3: #{tpu_custom_call.1} parent=1 // pred_check_branch
      %10 = sbr.rel (0) target = $region5
    $region4: #{tpu_custom_call.1} parent=1 // pred_region
      %s12 = ssub.s32 32, 32
      %13 = vsyncadd [#allocation3], %s12
      %s15 = sshll.u32 [#allocation2], 4
      %s16 = int_to_ptr.vmem [resolvable:$true] %s15
      %18 = dma.hbm_to_vmem [thread:$0]  %s0, 32, %s16, [#allocation3]
    $region5: #{tpu_custom_call.1} parent=1 // pred_fallthru
      _
    // Predicated region
    $region6: #{tpu_custom_call.1} parent=1 // pred_check
      _
    $region7: #{tpu_custom_call.1} parent=1 // pred_check_branch
      %20 = sbr.rel (0) target = $region9
    $region8: #{tpu_custom_call.1} parent=1 // pred_region
      _
    $region9: #{tpu_custom_call.1} parent=1 // pred_fallthru
      _
    // Predicated region
    $region10: #{tpu_custom_call.1} parent=1 // pred_check
      _
    $region11: #{tpu_custom_call.1} parent=1 // pred_check_branch
      %22 = sbr.rel (0) target = $region13
    $region12: #{tpu_custom_call.1} parent=1 // pred_region
      %23 = dma.done [#allocation3], 32
    $region13: #{tpu_custom_call.1} parent=1 // pred_fallthru
      _
    %v24 = vld [vmem:[%s1] sm:$0x1]
    %v25 = vxor.u32 %v24, 2147483648
    %v26 = vmul.f32 %v25, 1.442695
    %v27 = vpow.pop %v26
    %v28 = vadd.f32 %v27, 1.0
    %v29 = vrcp.pop %v28
    %v30 = vmul.f32 1.0, %v29
    %v31 = vld [vmem:[#allocation2] sm:$0x3]
    %v33 = vlaneseq
    %v34 = vshrl.u32 %v33, 7
    %v35 = vsub.s32 0, %v34
    %v36 = vrot.slane %v30, %v35
    %v38 = vmul.f32 %v31, %v36
    %39 = vst [vmem:[#allocation5] sm:$0x3] %v38
    // Predicated region
    $region14: #{tpu_custom_call.1} parent=1 // pred_check
      _
    $region15: #{tpu_custom_call.1} parent=1 // pred_check_branch
      %41 = sbr.rel (0) target = $region17
    $region16: #{tpu_custom_call.1} parent=1 // pred_region
      %s43 = ssub.s32 32, 32
      %44 = vsyncadd [#allocation4], %s43
      %s46 = sshll.u32 [#allocation5], 4
      %s47 = int_to_ptr.vmem [resolvable:$true] %s46
      %49 = dma.vmem_to_hbm [thread:$0]  %s47, 32, %s2, [#allocation4]
    $region17: #{tpu_custom_call.1} parent=1 // pred_fallthru
      _
    // Predicated region
    $region18: #{tpu_custom_call.1} parent=1 // pred_check
      _
    $region19: #{tpu_custom_call.1} parent=1 // pred_check_branch
      %51 = sbr.rel (0) target = $region21
    $region20: #{tpu_custom_call.1} parent=1 // pred_region
      %52 = dma.done [#allocation4], 32
    $region21: #{tpu_custom_call.1} parent=1 // pred_fallthru
      _
    %53 = vsyncpa [#allocation3], 1
    %54 = vsyncpa [#allocation4], 1

</llo_original>
